<compile_context>
chip_gen: v7x
topology: tpu7x:2x2x1
jax: 0.10.0
libtpu: 0.0.40
codegen_flags: <defaults>
</compile_context>

<pallas_src>
import functools

import jax
import jax.numpy as jnp
from jax import lax
from jax.experimental import pallas as pl
from jax.experimental.pallas import tpu as pltpu

_LANE = 128


def _round_up(x: int, m: int) -> int:
    return (x + m - 1) // m * m


def _vmem_capacity_bytes() -> int:
    try:
        return int(pltpu.get_tpu_info().vmem_capacity_bytes)
    except Exception:
        return 64 * 1024 * 1024  # v7x per-TC capacity: the most conservative


def _pick_sub_rows(t_rows: int) -> int:
    """Compute sub-tile rows: keeps the f32 accumulator <= 4 vregs."""
    if t_rows <= 32:
        return t_rows
    for cand in (32, 16, 8):
        if t_rows % cand == 0:
            return cand
    raise AssertionError("t_rows > 32 must be a multiple of 8")


def _disp_regression_kernel(x_ref, o_ref, *, sub_rows: int, d_unroll: int):
    # x_ref: (D, tR, 128) in input dtype; o_ref: (tR, 128) in input dtype.
    D = x_ref.shape[0]
    t_rows = x_ref.shape[1]
    lanes = x_ref.shape[2]
    n_sub = t_rows // sub_rows  # exact by construction

    @pl.loop(0, n_sub)
    def _(j):
        r0 = pl.multiple_of(j * sub_rows, sub_rows)

        def body(d, acc):
            # One small (sub_rows, 128) slice per disparity bin: tiny vreg
            # live range, scalar disparity weight, f32 accumulation.
            sl = x_ref[d, pl.ds(r0, sub_rows), :].astype(jnp.float32)
            return acc + sl * d.astype(jnp.float32)

        acc = lax.fori_loop(
            0, D, body,
            jnp.zeros((sub_rows, lanes), jnp.float32),
            unroll=d_unroll,
        )
        o_ref[pl.ds(r0, sub_rows), :] = acc.astype(o_ref.dtype)


def disparity_regression(
    x: jax.Array,
    *,
    block_budget_bytes: int = 16 * 1024 * 1024,
) -> jax.Array:
    """x: (B, D, H, W) float array -> (B, 1, H, W)."""
    B, D, H, W = x.shape
    dtype = x.dtype
    itemsize = jnp.dtype(dtype).itemsize
    S = H * W

    vmem_cap = _vmem_capacity_bytes()
    budget = min(block_budget_bytes, vmem_cap // 5)

    # dtype-dependent sublane alignment: 8 (f32) / 16 (bf16) / 32 (int8).
    sub_align = max(8, 32 // itemsize)

    R = _round_up(S, _LANE) // _LANE        # spatial rows of 128 lanes
    row_bytes = D * _LANE * itemsize        # one spatial row across all bins

    if R * row_bytes <= budget:
        # Whole spatial extent in a single block per batch element.
        t_rows = R if R <= 32 else _round_up(R, sub_align)
        R_pad = t_rows
    else:
        t_budget = max(sub_align, (budget // row_bytes) // sub_align * sub_align)
        # Prefer a divisor of R (no padding); otherwise pad R to a tile multiple.
        t_rows = None
        cand = min(t_budget, (R // sub_align) * sub_align)
        lo = max(sub_align, t_budget // 2)
        while cand >= lo:
            if R % cand == 0:
                t_rows = cand
                break
            cand -= sub_align
        if t_rows is None:
            t_rows = t_budget
            R_pad = _round_up(R, t_rows)
        else:
            R_pad = R

    S_pad = R_pad * _LANE
    n_spatial = R_pad // t_rows

    # VMEM accounting: double-buffered input + output blocks + slack, under an
    # explicit limit sized per generation (never exceed 3/4 of physical VMEM).
    block_bytes = D * t_rows * _LANE * itemsize
    out_block_bytes = t_rows * _LANE * itemsize
    needed = 2 * (block_bytes + out_block_bytes) + (8 << 20)
    vmem_limit = min(vmem_cap * 3 // 4, max(32 << 20, needed))
    assert needed <= vmem_limit, (
        f"tiling needs {needed} B of VMEM (2x{block_bytes} B blocks) but the "
        f"scoped limit is {vmem_limit} B; lower block_budget_bytes"
    )

    # Reshape (and lane-pad only if needed) to (B, D, R_pad, 128).
    x3 = x.reshape(B, D, S)
    if S_pad != S:
        x3 = jnp.pad(x3, ((0, 0), (0, 0), (0, S_pad - S)))
    x4 = x3.reshape(B, D, R_pad, _LANE)

    sub_rows = _pick_sub_rows(t_rows)
    d_unroll = min(D, 8 if sub_rows <= 8 else 4)

    kernel = functools.partial(
        _disp_regression_kernel, sub_rows=sub_rows, d_unroll=d_unroll
    )

    out_flat = pl.pallas_call(
        kernel,
        out_shape=jax.ShapeDtypeStruct((B, R_pad, _LANE), dtype),
        grid_spec=pltpu.PrefetchScalarGridSpec(
            num_scalar_prefetch=0,
            grid=(B, n_spatial),
            in_specs=[
                pl.BlockSpec((None, D, t_rows, _LANE), lambda b, j: (b, 0, j, 0)),
            ],
            out_specs=pl.BlockSpec((None, t_rows, _LANE), lambda b, j: (b, j, 0)),
        ),
        compiler_params=pltpu.CompilerParams(
            dimension_semantics=("parallel", "parallel"),
            vmem_limit_bytes=int(vmem_limit),
        ),
    )(x4)

    return out_flat.reshape(B, S_pad)[:, :S].reshape(B, 1, H, W)


def disparity_regression_ref(x: jax.Array) -> jax.Array:
    D = x.shape[1]
    disp = jnp.arange(D, dtype=jnp.float32).reshape(1, D, 1, 1)
    return jnp.sum(x.astype(jnp.float32) * disp, axis=1, keepdims=True)


if __name__ == "__main__":
    key = jax.random.PRNGKey(0)
    B, D, H, W = 2, 4, 16, 16  # maxdisp = 4

    # In the real model x is a softmax over D; any float input works here.
    logits = jax.random.normal(key, (B, D, H, W), dtype=jnp.float32)
    x = jax.nn.softmax(logits, axis=1)

    # f32 path
    out = jax.block_until_ready(disparity_regression(x))
    ref = disparity_regression_ref(x)
    assert out.shape == (B, 1, H, W), out.shape
    assert jnp.allclose(out, ref, atol=1e-5, rtol=1e-5), "f32 mismatch vs reference"

    # bf16 path (kernel accumulates in f32, casts result back to bf16)
    xb = x.astype(jnp.bfloat16)
    out_b = jax.block_until_ready(disparity_regression(xb))
    ref_b = disparity_regression_ref(xb)
    assert out_b.dtype == jnp.bfloat16
    assert jnp.allclose(
        out_b.astype(jnp.float32), ref_b, atol=3e-2, rtol=3e-2
    ), "bf16 mismatch vs reference"

    # Spatial extent not divisible by 128 (exercises the lane-padding fallback).
    H2, W2 = 10, 10
    x2 = jax.nn.softmax(
        jax.random.normal(jax.random.PRNGKey(0), (B, D, H2, W2), jnp.float32), axis=1
    )
    out2 = jax.block_until_ready(disparity_regression(x2))
    ref2 = disparity_regression_ref(x2)
    assert out2.shape == (B, 1, H2, W2), out2.shape
    assert jnp.allclose(out2, ref2, atol=1e-5, rtol=1e-5), "padded-path mismatch"

    print("KERNEL_OK")
</pallas_src>

<mosaic_0001>
module attributes {stable_mosaic.version = 11 : i64} {
  func.func @_disp_regression_kernel(%arg0: i32, %arg1: i32, %arg2: memref<1x4x2x128xf32, #tpu.memory_space<vmem>>, %arg3: memref<1x2x128xf32, #tpu.memory_space<vmem>>) attributes {dimension_semantics = [#tpu.dimension_semantics<parallel>, #tpu.dimension_semantics<parallel>], iteration_bounds = array<i64: 2, 1>, scalar_prefetch = 0 : i64, scratch_operands = 0 : i64, tpu.core_type = #tpu.core_type<tc>, window_params = [{transform_indices = @transform_0, window_bounds = array<i64: 1, 4, 2, 128>}, {transform_indices = @transform_1, window_bounds = array<i64: 1, 2, 128>}]} {
    %c0_i32 = arith.constant 0 : i32
    %c1_i32 = arith.constant 1 : i32
    %0 = arith.muli %c0_i32, %c1_i32 : i32
    %c0_i32_0 = arith.constant 0 : i32
    %1 = arith.addi %c0_i32_0, %0 : i32
    %c2_i32 = arith.constant 2 : i32
    %2 = arith.muli %1, %c2_i32 : i32
    %3 = tpu.assume_multiple %2, 2 : i32
    %cst = arith.constant 0.000000e+00 : f32
    %4 = vector.broadcast %cst : f32 to vector<2x128xf32>
    %c0_i32_1 = arith.constant 0 : i32
    %c0 = arith.constant 0 : index
    %5 = arith.index_cast %c0_i32_1 : i32 to index
    %6 = arith.index_cast %3 : i32 to index
    %c0_2 = arith.constant 0 : index
    %7 = vector.load %arg2[%c0, %5, %6, %c0_2] : memref<1x4x2x128xf32, #tpu.memory_space<vmem>>, vector<1x1x2x128xf32>
    %8 = vector.shape_cast %7 : vector<1x1x2x128xf32> to vector<2x128xf32>
    %9 = arith.sitofp %c0_i32_1 : i32 to f32
    %10 = vector.broadcast %9 : f32 to vector<2x128xf32>
    %11 = arith.mulf %8, %10 : vector<2x128xf32>
    %12 = arith.addf %4, %11 : vector<2x128xf32>
    %c1_i32_3 = arith.constant 1 : i32
    %c0_4 = arith.constant 0 : index
    %13 = arith.index_cast %c1_i32_3 : i32 to index
    %14 = arith.index_cast %3 : i32 to index
    %c0_5 = arith.constant 0 : index
    %15 = vector.load %arg2[%c0_4, %13, %14, %c0_5] : memref<1x4x2x128xf32, #tpu.memory_space<vmem>>, vector<1x1x2x128xf32>
    %16 = vector.shape_cast %15 : vector<1x1x2x128xf32> to vector<2x128xf32>
    %17 = arith.sitofp %c1_i32_3 : i32 to f32
    %18 = vector.broadcast %17 : f32 to vector<2x128xf32>
    %19 = arith.mulf %16, %18 : vector<2x128xf32>
    %20 = arith.addf %12, %19 : vector<2x128xf32>
    %c2_i32_6 = arith.constant 2 : i32
    %c0_7 = arith.constant 0 : index
    %21 = arith.index_cast %c2_i32_6 : i32 to index
    %22 = arith.index_cast %3 : i32 to index
    %c0_8 = arith.constant 0 : index
    %23 = vector.load %arg2[%c0_7, %21, %22, %c0_8] : memref<1x4x2x128xf32, #tpu.memory_space<vmem>>, vector<1x1x2x128xf32>
    %24 = vector.shape_cast %23 : vector<1x1x2x128xf32> to vector<2x128xf32>
    %25 = arith.sitofp %c2_i32_6 : i32 to f32
    %26 = vector.broadcast %25 : f32 to vector<2x128xf32>
    %27 = arith.mulf %24, %26 : vector<2x128xf32>
    %28 = arith.addf %20, %27 : vector<2x128xf32>
    %c3_i32 = arith.constant 3 : i32
    %c0_9 = arith.constant 0 : index
    %29 = arith.index_cast %c3_i32 : i32 to index
    %30 = arith.index_cast %3 : i32 to index
    %c0_10 = arith.constant 0 : index
    %31 = vector.load %arg2[%c0_9, %29, %30, %c0_10] : memref<1x4x2x128xf32, #tpu.memory_space<vmem>>, vector<1x1x2x128xf32>
    %32 = vector.shape_cast %31 : vector<1x1x2x128xf32> to vector<2x128xf32>
    %33 = arith.sitofp %c3_i32 : i32 to f32
    %34 = vector.broadcast %33 : f32 to vector<2x128xf32>
    %35 = arith.mulf %32, %34 : vector<2x128xf32>
    %36 = arith.addf %28, %35 : vector<2x128xf32>
    %c4_i32 = arith.constant 4 : i32
    %c0_11 = arith.constant 0 : index
    %37 = arith.index_cast %3 : i32 to index
    %c0_12 = arith.constant 0 : index
    %38 = vector.load %arg3[%c0_11, %37, %c0_12] : memref<1x2x128xf32, #tpu.memory_space<vmem>>, vector<1x2x128xf32>
    %39 = vector.shape_cast %38 : vector<1x2x128xf32> to vector<2x128xf32>
    %40 = vector.shape_cast %36 : vector<2x128xf32> to vector<1x2x128xf32>
    tpu.vector_store %arg3[%c0_11, %37, %c0_12], %40 {strides = array<i32>} : memref<1x2x128xf32, #tpu.memory_space<vmem>>, vector<1x2x128xf32>,
    %c1_i32_13 = arith.constant 1 : i32
    return
  }
  func.func @transform_0(%arg0: i32, %arg1: i32) -> (i32, i32, i32, i32) {
    %c0_i32 = arith.constant 0 : i32
    %c0_i32_0 = arith.constant 0 : i32
    %c0_i32_1 = arith.constant 0 : i32
    return %arg0, %c0_i32, %arg1, %c0_i32_0 : i32, i32, i32, i32
  }
  func.func @transform_1(%arg0: i32, %arg1: i32) -> (i32, i32, i32) {
    %c0_i32 = arith.constant 0 : i32
    %c0_i32_0 = arith.constant 0 : i32
    return %arg0, %arg1, %c0_i32 : i32, i32, i32
  }
}

</mosaic_0001>

<llo_original>
// kernel: tpu_custom_call.1
$region0: #{tpu_custom_call.1}
  #allocation0 [shape = 'u32[]', space=smem, size = 0x4, offset = 0x4, fixed_abs, tag = 'smem constant byte address 0x4 - core index']
  #allocation1 [shape = 'u32[144,128]{1,0:T(1,128)}', space=vmem, size = 0x12000, scoped, tag = 'internal scratch']
  %s0 = inlined_call_operand.hbm [shape: f32[2,4,2,128], index: 0, kind: input, shape index: {}]
  %s1 = inlined_call_operand.hbm [shape: f32[2,2,128], index: 1, kind: output, shape index: {}]
  %s2 = sld [smem:[#allocation0]]
  $region41: #{tpu_custom_call.1} parent=0
    _
  %s4 = ssub.s32 1, %s2
  %s5 = scalar_select 0, %s4, %s2
  $region1: #{tpu_custom_call.1} parent=0
    #allocation2 [shape = 'u8[8192]{0}', space=vmem, size = 0x2000, scoped, tag = 'input window, operand 0']
    #allocation3 [shape = 's32[2]{0}', space=sflag, size = 0x8, scoped, tag = 'scoped memory for tpu_custom_call.1']
    #allocation4 [shape = 's32[2]{0}', space=sflag, size = 0x8, scoped, tag = 'scoped memory for tpu_custom_call.1']
    #allocation5 [shape = 'u8[2048]{0}', space=vmem, size = 0x800, scoped, tag = 'output window, operand 0']
    %6 = vsyncpa [#allocation3], 0
    %s7 = scalar_lea.sflag [#allocation3], 1
    %8 = vsyncpa %s7, 0
    %9 = vsyncpa [#allocation4], 0
    %s10 = scalar_lea.sflag [#allocation4], 1
    %11 = vsyncpa %s10, 0
    loop: start=0, step=1, limit=4
    $region2: #{tpu_custom_call.1} parent=1 // loop_pre_header
      _
    $region3: #{tpu_custom_call.1} parent=1 // loop_header
      %s13 = sphi 0, %s17
      %p14 = scmp.ge.s32.totalorder %s13, 4
      %s20 = sphi 0, %s32
      %s21 = sphi 0, %s28
      %s22 = sphi 0, %s20
      %s23 = sphi 0, %s21
      %s24 = sphi 0, %s22
      %s25 = sphi 0, %s23
      %s37 = sphi 0, %s39
      %s40 = sphi 0, %s37
      %s41 = sphi 0, %s40
      %s57 = sphi 0, %s41
      %s65 = sphi 0, %s67
      %s68 = sphi 0, %s65
      %s69 = sphi 0, %s68
      %s85 = sphi 0, %s69
    $region4: #{tpu_custom_call.1} parent=1 // loop_header_branch
      %16 = sbr.rel (%p14) target = $region8
    $region5: #{tpu_custom_call.1} parent=1 // loop_body
      %s18 = ssub.s32 %s13, 1
      %s19 = ssub.s32 %s13, 2
      %s26 = sadd.s32 1, %s21
      %p27 = scmp.ge.s32.totalorder %s26, 1
      %s28 = scalar_select %p27, 0, %s26
      %s29 = sadd.s32 1, %s20
      %s30 = scalar_select %p27, %s29, %s20
      %p31 = scmp.ge.s32.totalorder %s30, 2
      %s32 = scalar_select %p31, 0, %s30
      %s33 = ssub.s32 %s20, %s32
      %s34 = ssub.s32 %s21, %s28
      %s35 = sor.u32 %s33, %s34
      %p36 = scmp.eq.s32.totalorder %s35, 0
      %s38 = sadd.s32 %s37, 1
      %s39 = scalar_select %p36, %s37, %s38
      %p42 = pneg %p36
      %p43 = scmp.eq.s32.totalorder %s13, 1
      %p44 = por %p42, %p43
      %p45 = scmp.ne.s32.totalorder %s37, %s40
      %p46 = scmp.eq.s32.totalorder %s13, 0
      %p47 = por %p45, %p46
      %p48 = scmp.ne.s32.totalorder %s37, %s40
      %p49 = scmp.eq.s32.totalorder %s18, 1
      %p50 = por %p48, %p49
      %p51 = scmp.ne.s32.totalorder %s40, %s41
      %p52 = scmp.eq.s32.totalorder %s18, 0
      %p53 = por %p51, %p52
      %p54 = scmp.ne.s32.totalorder %s40, %s41
      %p55 = scmp.eq.s32.totalorder %s19, 1
      %p56 = por %p54, %p55
      %p58 = scmp.ne.s32.totalorder %s41, %s57
      %p59 = scmp.eq.s32.totalorder %s19, 0
      %p60 = por %p58, %p59
      %s61 = ssub.s32 %s20, %s32
      %s62 = ssub.s32 %s21, %s28
      %s63 = sor.u32 %s61, %s62
      %p64 = scmp.eq.s32.totalorder %s63, 0
      %s66 = sadd.s32 %s65, 1
      %s67 = scalar_select %p64, %s65, %s66
      %p70 = pneg %p64
      %p71 = scmp.eq.s32.totalorder %s13, 1
      %p72 = por %p70, %p71
      %p73 = scmp.ne.s32.totalorder %s65, %s68
      %p74 = scmp.eq.s32.totalorder %s13, 0
      %p75 = por %p73, %p74
      %p76 = scmp.ne.s32.totalorder %s65, %s68
      %p77 = scmp.eq.s32.totalorder %s18, 1
      %p78 = por %p76, %p77
      %p79 = scmp.ne.s32.totalorder %s68, %s69
      %p80 = scmp.eq.s32.totalorder %s18, 0
      %p81 = por %p79, %p80
      %p82 = scmp.ne.s32.totalorder %s68, %s69
      %p83 = scmp.eq.s32.totalorder %s19, 1
      %p84 = por %p82, %p83
      %p86 = scmp.ne.s32.totalorder %s69, %s85
      %p87 = scmp.eq.s32.totalorder %s19, 0
      %p88 = por %p86, %p87
      %p89 = scmp.le.s32.totalorder 1, %s13
      %p90 = scmp.lt.s32.totalorder %s13, 3
      %p91 = pnand %p89, %p90
      %p92 = pneg %p91
      // Predicated region
      $region9: #{tpu_custom_call.1} parent=5 // pred_check
        _
      $region10: #{tpu_custom_call.1} parent=5 // pred_check_branch
        %94 = sbr.rel (%p91) target = $region12
      $region11: #{tpu_custom_call.1} parent=5 // pred_region
        %s95 = ssub.s32 %s13, 1
      $region12: #{tpu_custom_call.1} parent=5 // pred_fallthru
        _
      %p96 = scmp.lt.s32.totalorder %s13, 2
      // Predicated region
      $region13: #{tpu_custom_call.1} parent=5 // pred_check
        %p97 = pneg %p96
      $region14: #{tpu_custom_call.1} parent=5 // pred_check_branch
        %99 = sbr.rel (%p97) target = $region16
      $region15: #{tpu_custom_call.1} parent=5 // pred_region
        // Predicated region
        $region17: #{tpu_custom_call.1} parent=15 // pred_check
          %p100 = pneg %p47
        $region18: #{tpu_custom_call.1} parent=15 // pred_check_branch
          %102 = sbr.rel (%p100) target = $region20
        $region19: #{tpu_custom_call.1} parent=15 // pred_region
          %s103 = sand.u32 %s37, 1
          %s104 = scalar_lea.sflag [#allocation3], %s103
          %s105 = sand.u32 %s37, 1
          %s106 = smul.addr %s105, 8
          %s107 = scalar_lea.vmem [#allocation2], %s106
          %s109 = ssub.s32 128, 128
          %110 = vsyncadd %s104, %s109
          %s111 = smul.addr %s20, 4
          %s112 = sadd.s32 %s21, %s111
          %s113 = smul.addr %s112, 32
          %s114 = scalar_lea.hbm %s0, %s113
          %s115 = sshll.u32 %s107, 4
          %s116 = int_to_ptr.vmem [resolvable:$true] %s115
          %121 = dma.hbm_to_vmem [thread:$0]  %s114, 128, %s116, %s104, 32, 32, 2
        $region20: #{tpu_custom_call.1} parent=15 // pred_fallthru
          _
      $region16: #{tpu_custom_call.1} parent=5 // pred_fallthru
        _
      %p122 = scmp.le.s32.totalorder 1, %s13
      %p123 = scmp.lt.s32.totalorder %s13, 3
      %p124 = pnand %p122, %p123
      %p125 = pneg %p124
      // Predicated region
      $region21: #{tpu_custom_call.1} parent=5 // pred_check
        _
      $region22: #{tpu_custom_call.1} parent=5 // pred_check_branch
        %127 = sbr.rel (%p124) target = $region24
      $region23: #{tpu_custom_call.1} parent=5 // pred_region
        %s128 = ssub.s32 %s13, 1
        %s129 = sand.u32 %s40, 1
        %s130 = scalar_lea.sflag [#allocation3], %s129
        %s131 = sand.u32 %s40, 1
        %s132 = smul.addr %s131, 8
        %s133 = scalar_lea.vmem [#allocation2], %s132
        // Predicated region
        $region25: #{tpu_custom_call.1} parent=23 // pred_check
          %p134 = pneg %p53
        $region26: #{tpu_custom_call.1} parent=23 // pred_check_branch
          %136 = sbr.rel (%p134) target = $region28
        $region27: #{tpu_custom_call.1} parent=23 // pred_region
          %137 = dma.done %s130, 128
        $region28: #{tpu_custom_call.1} parent=23 // pred_fallthru
          _
        %s138 = sand.u32 %s40, 1
        %s139 = scalar_lea.sflag [#allocation3], %s138
        %s140 = sand.u32 %s40, 1
        %s141 = smul.addr %s140, 8
        %s142 = scalar_lea.vmem [#allocation2], %s141
        %p143 = pneg %p53
        %p144 = pneg %p50
        %p145 = pneg %p81
        %p146 = pneg %p78
        %s147 = sand.u32 %s68, 1
        %s148 = scalar_lea.sflag [#allocation4], %s147
        %s149 = sand.u32 %s68, 1
        %s150 = smul.addr %s149, 2
        %s151 = scalar_lea.vmem [#allocation5], %s150
        %v152 = vld [vmem:[%s133] sm:$0x3]
        %v153 = vmul.f32 %v152, 0.0
        %v154 = vadd.f32 %v153, 0.0
        %s155 = sadd.s32 0, 2
        %s156 = scalar_lea.vmem %s133, %s155 [#allocation2]
        %v157 = vld [vmem:[%s156] sm:$0x3]
        %v158 = vadd.f32 %v154, %v157
        %s159 = sadd.s32 0, 4
        %s160 = scalar_lea.vmem %s133, %s159 [#allocation2]
        %v161 = vld [vmem:[%s160] sm:$0x3]
        %v162 = vmul.f32 %v161, 2.0
        %v163 = vadd.f32 %v158, %v162
        %s164 = sadd.s32 0, 6
        %s165 = scalar_lea.vmem %s133, %s164 [#allocation2]
        %v166 = vld [vmem:[%s165] sm:$0x3]
        %v167 = vmul.f32 %v166, 3.0
        %v168 = vadd.f32 %v163, %v167
        %169 = vst [vmem:[%s151] sm:$0x3] %v168
        %s170 = sand.u32 %s68, 1
        %s171 = scalar_lea.sflag [#allocation4], %s170
        %s172 = sand.u32 %s68, 1
        %s173 = smul.addr %s172, 2
        %s174 = scalar_lea.vmem [#allocation5], %s173
        // Predicated region
        $region29: #{tpu_custom_call.1} parent=23 // pred_check
          %p175 = pneg %p78
        $region30: #{tpu_custom_call.1} parent=23 // pred_check_branch
          %177 = sbr.rel (%p175) target = $region32
        $region31: #{tpu_custom_call.1} parent=23 // pred_region
          %s179 = ssub.s32 32, 32
          %180 = vsyncadd %s171, %s179
          %s181 = sadd.s32 %s23, %s22
          %s182 = smul.addr %s181, 32
          %s183 = scalar_lea.hbm %s1, %s182
          %s185 = sshll.u32 %s174, 4
          %s186 = int_to_ptr.vmem [resolvable:$true] %s185
          %188 = dma.vmem_to_hbm [thread:$0]  %s186, 32, %s183, %s171
        $region32: #{tpu_custom_call.1} parent=23 // pred_fallthru
          _
      $region24: #{tpu_custom_call.1} parent=5 // pred_fallthru
        _
      %p189 = scmp.le.s32.totalorder 2, %s13
      // Predicated region
      $region33: #{tpu_custom_call.1} parent=5 // pred_check
        %p190 = pneg %p189
      $region34: #{tpu_custom_call.1} parent=5 // pred_check_branch
        %192 = sbr.rel (%p190) target = $region36
      $region35: #{tpu_custom_call.1} parent=5 // pred_region
        %s193 = ssub.s32 %s13, 2
        // Predicated region
        $region37: #{tpu_custom_call.1} parent=35 // pred_check
          %p194 = pneg %p84
        $region38: #{tpu_custom_call.1} parent=35 // pred_check_branch
          %196 = sbr.rel (%p194) target = $region40
        $region39: #{tpu_custom_call.1} parent=35 // pred_region
          %s197 = sand.u32 %s69, 1
          %s198 = scalar_lea.sflag [#allocation4], %s197
          %s199 = sand.u32 %s69, 1
          %s200 = smul.addr %s199, 2
          %s201 = scalar_lea.vmem [#allocation5], %s200
          %202 = dma.done %s198, 32
        $region40: #{tpu_custom_call.1} parent=35 // pred_fallthru
          _
      $region36: #{tpu_custom_call.1} parent=5 // pred_fallthru
        _
    $region6: #{tpu_custom_call.1} parent=1 // loop_footer
      %s17 = sadd.s32 1, %s13
    $region7: #{tpu_custom_call.1} parent=1 // loop_footer_branch
      %12 = sbr.rel target = $region3
    $region8: #{tpu_custom_call.1} parent=1 // loop_exit
      _
    %203 = vsyncpa [#allocation3], 1
    %s204 = scalar_lea.sflag [#allocation3], 1
    %205 = vsyncpa %s204, 1
    %206 = vsyncpa [#allocation4], 1
    %s207 = scalar_lea.sflag [#allocation4], 1
    %208 = vsyncpa %s207, 1

</llo_original>
